<compile_context>
chip_gen: v7x
topology: tpu7x:2x2x1
jax: 0.10.0
libtpu: 0.0.40
codegen_flags: <defaults>
</compile_context>

<pallas_src>
import functools

import jax
import jax.numpy as jnp
from jax.experimental import pallas as pl
from jax.experimental.pallas import tpu as pltpu


# --------------------------------------------------------------------------
# Glimpse sensor (glue, plain JAX).  Standard RAM sensor: n_patches patches of
# side patch_size * scale**i centered at `location` (in [-1, 1] coords), each
# avg-pooled down to patch_size x patch_size, concatenated and flattened.
# Emits bf16 so the cast fuses with the pooling reduction.
# TODO(synk): lax.dynamic_slice clamps out-of-bounds starts; a zero-padding
# sensor variant would differ slightly for edge locations.
# --------------------------------------------------------------------------
def _extract_one(img, loc, patch_size, n_patches, scale):
    # img: (C, H, W), loc: (2,) in [-1, 1]  (loc[0] -> y, loc[1] -> x)
    C, H, W = img.shape
    pieces = []
    for i in range(n_patches):
        size = patch_size * (scale ** i)
        cy = (loc[0] + 1.0) * 0.5 * H
        cx = (loc[1] + 1.0) * 0.5 * W
        sy = jnp.round(cy - size / 2.0).astype(jnp.int32)
        sx = jnp.round(cx - size / 2.0).astype(jnp.int32)
        patch = jax.lax.dynamic_slice(img, (0, sy, sx), (C, size, size))
        k = scale ** i
        # average-pool resize (size, size) -> (patch_size, patch_size), cast bf16
        patch = patch.reshape(C, patch_size, k, patch_size, k).mean(axis=(2, 4))
        pieces.append(patch.astype(jnp.bfloat16))
    # (n_patches, C, ps, ps) -> flat, matching torch.cat(dim=1).view(B, -1)
    return jnp.stack(pieces, axis=0).reshape(-1)


def glimpse_sensor(image, location, patch_size, n_patches, scale):
    return jax.vmap(
        functools.partial(
            _extract_one,
            patch_size=patch_size,
            n_patches=n_patches,
            scale=scale,
        )
    )(image, location)


# --------------------------------------------------------------------------
# Pallas kernel: the fused MLP
#   h_g = relu(g @ Wg + bg)                          ; MXU, bf16 in / f32 acc
#   h_l = relu(loc0*Wl[0] + loc1*Wl[1] + bl)         ; VPU (K=2 -> no MXU pass)
#   out = relu(h_g @ W2[:hid] + h_l @ W2[hid:] + b2) ; two K=hid MXU dots,
#                                                      f32 accumulation, no concat
# where W2 = [Wgo; Wlo], b2 = bgo + blo  (mathematically == o_g + o_l).
# --------------------------------------------------------------------------
def glimpse_net_kernel(
    hid,
    g_ref, loc_ref,
    wg_ref, bg_ref,
    wl_ref, bl_ref,
    w2_ref, b2_ref,
    out_ref,
):
    i = pl.program_id(0)
    tb = g_ref.shape[0]
    g = g_ref[...]                                       # (TB, Dg)  bf16

    # Resident (Bp, 2) location array: slice this tile's rows (sublane aligned).
    row0 = pl.multiple_of(i * tb, tb)
    loc = loc_ref[pl.ds(row0, tb), :].astype(jnp.float32)  # (TB, 2) f32

    # --- glimpse path, layer 1 (MXU) --------------------------------------
    h_g = jnp.dot(g, wg_ref[...], preferred_element_type=jnp.float32)
    h_g = jnp.maximum(h_g + bg_ref[...], 0.0)            # (TB, hid) f32

    # --- location path, layer 1 (VPU; K=2 -> no MXU pass) ------------------
    wl0 = wl_ref[0:1, :]                                  # (1, hid) f32
    wl1 = wl_ref[1:2, :]                                  # (1, hid) f32
    h_l = loc[:, 0:1] * wl0 + loc[:, 1:2] * wl1 + bl_ref[...]
    h_l = jnp.maximum(h_l, 0.0)                           # (TB, hid) f32

    # --- fused output layer: two dots on static slices of resident w2 ------
    o = jnp.dot(h_g.astype(jnp.bfloat16), w2_ref[0:hid, :],
                preferred_element_type=jnp.float32)
    o = o + jnp.dot(h_l.astype(jnp.bfloat16), w2_ref[hid:2 * hid, :],
                    preferred_element_type=jnp.float32)
    o = o + b2_ref[...]
    out_ref[...] = jnp.maximum(o, 0.0).astype(out_ref.dtype)


# --------------------------------------------------------------------------
# Wrapper: sensor glue + batch-tiled pallas_call.
# --------------------------------------------------------------------------
@functools.partial(
    jax.jit,
    static_argnames=("patch_size", "n_patches", "scale", "block_b", "out_dtype"),
)
def glimpse_network_forward(
    image, location, params, *, patch_size, n_patches, scale,
    block_b=512, out_dtype=jnp.bfloat16,
):
    glimpse = glimpse_sensor(image, location, patch_size, n_patches, scale)
    B, Dg_raw = glimpse.shape
    Dg = params["wg"].shape[0]            # already padded to a multiple of 128
    hid = params["wg"].shape[1]
    out_dim = params["w2"].shape[1]
    out_bytes = jnp.dtype(out_dtype).itemsize

    # Batch tile: biggest tile up to block_b, but aim for >=2 grid steps so the
    # parallel axis can be sharded across both v7x TensorCores.
    half = -(-B // 2)
    half8 = max(8, -(-half // 8) * 8)
    TB = min(block_b, half8)
    Bp = -(-B // TB) * TB
    grid = (Bp // TB,)

    loc = location.astype(jnp.float32)
    pad_rows = Bp - B
    pad_cols = Dg - Dg_raw
    if pad_rows or pad_cols:
        glimpse = jnp.pad(glimpse, ((0, pad_rows), (0, pad_cols)))
    if pad_rows:
        loc = jnp.pad(loc, ((0, pad_rows), (0, 0)))

    row_spec = lambda cols: pl.BlockSpec((TB, cols), lambda i: (i, 0))
    resident = lambda shape: pl.BlockSpec(shape, lambda i: (0, 0))

    # Glimpse input spec: go 3-deep on the pipeline only when the tile is tiny
    # (latency mode) and the grid is long enough for it to matter.
    n_buf_g = 3 if (TB <= 128 and grid[0] >= 3) else 2
    if n_buf_g == 3:
        g_spec = pl.BlockSpec((TB, Dg), lambda i: (i, 0),
                              pipeline_mode=pl.Buffered(3))
    else:
        g_spec = row_spec(Dg)

    # Tight VMEM budget: resident weights + resident loc + pipelined row tiles,
    # with 2x headroom (never the full physical VMEM).
    resident_bytes = (
        params["wg"].size * 2 + params["w2"].size * 2
        + params["wl"].size * 4
        + (params["bg"].size + params["bl"].size + params["b2"].size) * 4
        + Bp * 2 * 4                                     # resident location
    )
    pipeline_bytes = n_buf_g * TB * Dg * 2 + 2 * TB * out_dim * out_bytes
    vmem_limit = int(min(48 * 1024 * 1024,
                         max(8 * 1024 * 1024,
                             2 * (resident_bytes + pipeline_bytes))))

    flops = 2 * Bp * (Dg * hid + (2 * hid) * out_dim)
    bytes_accessed = (
        glimpse.size * 2 + loc.size * 4
        + resident_bytes
        + Bp * out_dim * out_bytes
    )

    out = pl.pallas_call(
        functools.partial(glimpse_net_kernel, hid),
        out_shape=jax.ShapeDtypeStruct((Bp, out_dim), out_dtype),
        grid=grid,
        in_specs=[
            g_spec,                              # glimpse  (bf16), pipelined
            resident((Bp, 2)),                   # location (f32), VMEM-resident
            resident((Dg, hid)),                 # wg  (bf16)
            resident((1, hid)),                  # bg  (f32)
            resident((2, hid)),                  # wl  (f32)
            resident((1, hid)),                  # bl  (f32)
            resident((2 * hid, out_dim)),        # w2  (bf16)
            resident((1, out_dim)),              # b2  (f32)
        ],
        out_specs=row_spec(out_dim),
        compiler_params=pltpu.CompilerParams(
            dimension_semantics=("parallel",),
            vmem_limit_bytes=vmem_limit,
        ),
        cost_estimate=pl.CostEstimate(
            flops=flops, transcendentals=0, bytes_accessed=bytes_accessed
        ),
    )(
        glimpse, loc,
        params["wg"], params["bg"],
        params["wl"], params["bl"],
        params["w2"], params["b2"],
    )
    return out[:B]


# --------------------------------------------------------------------------
# Deterministic parameter init (PyTorch nn.Linear default: U(-1/sqrt(in), 1/sqrt(in))).
# Weights stored as (in_features, out_features); biases as (1, out_features).
# The two output-layer Linears are fused: w2 = [wgo; wlo], b2 = bgo + blo.
# Matmul weights (wg, w2) are stored in bf16; f32 accumulation in the kernel.
# wg rows are zero-padded to a multiple of 128 for dense MXU tiles.
# --------------------------------------------------------------------------
def init_linear(key, in_dim, out_dim):
    kw, kb = jax.random.split(key)
    bound = 1.0 / (in_dim ** 0.5)
    w = jax.random.uniform(kw, (in_dim, out_dim), jnp.float32, -bound, bound)
    b = jax.random.uniform(kb, (1, out_dim), jnp.float32, -bound, bound)
    return w, b


def init_params(key, n_channels, patch_size, n_patches, glimpse_hid_dim, location_hid_dim):
    # NOTE: fc_glimpse_out is declared with in_features=location_hid_dim in the
    # reference module but is applied to the glimpse_hid_dim-sized activation;
    # this only type-checks (and the W2 fusion is only valid) when the two match.
    assert glimpse_hid_dim == location_hid_dim, (
        "GlimpseNetwork reference requires glimpse_hid_dim == location_hid_dim")

    glimpse_in = n_patches * n_channels * patch_size * patch_size
    out_dim = glimpse_hid_dim + location_hid_dim
    k1, k2, k3, k4 = jax.random.split(key, 4)
    wg, bg = init_linear(k1, glimpse_in, glimpse_hid_dim)
    wgo, bgo = init_linear(k2, location_hid_dim, out_dim)
    wl, bl = init_linear(k3, 2, location_hid_dim)
    wlo, blo = init_linear(k4, location_hid_dim, out_dim)

    # Zero-pad the glimpse-input dim to a lane-dense multiple of 128.
    glimpse_in_pad = -(-glimpse_in // 128) * 128
    if glimpse_in_pad != glimpse_in:
        wg = jnp.pad(wg, ((0, glimpse_in_pad - glimpse_in), (0, 0)))

    w2 = jnp.concatenate([wgo, wlo], axis=0)    # (2*hid, out_dim)
    b2 = bgo + blo                              # (1, out_dim)

    return dict(
        wg=wg.astype(jnp.bfloat16), bg=bg,
        wl=wl, bl=bl,
        w2=w2.astype(jnp.bfloat16), b2=b2,
    )


if __name__ == "__main__":
    # Small, module-consistent shapes.
    B, C, H, W = 2, 1, 32, 32
    patch_size, n_patches, scale = 8, 3, 2
    glimpse_hid_dim = location_hid_dim = 128   # must match (see NOTE above)

    key = jax.random.PRNGKey(0)
    k_img, k_loc, k_par = jax.random.split(key, 3)

    image = jax.random.normal(k_img, (B, C, H, W), jnp.float32)       # NCHW
    location = jax.random.uniform(k_loc, (B, 2), jnp.float32, -1.0, 1.0)

    params = init_params(k_par, C, patch_size, n_patches,
                         glimpse_hid_dim, location_hid_dim)

    out = glimpse_network_forward(
        image, location, params,
        patch_size=patch_size, n_patches=n_patches, scale=scale,
    )
    out = jax.block_until_ready(out)
    assert out.shape == (B, glimpse_hid_dim + location_hid_dim)
    assert bool(jnp.all(jnp.isfinite(out.astype(jnp.float32))))
    print("KERNEL_OK")
</pallas_src>

<mosaic_0001>
module attributes {stable_mosaic.version = 11 : i64} {
  func.func @glimpse_net_kernel(%arg0: i32, %arg1: memref<8x256xbf16, #tpu.memory_space<vmem>>, %arg2: memref<8x2xf32, #tpu.memory_space<vmem>>, %arg3: memref<256x128xbf16, #tpu.memory_space<vmem>>, %arg4: memref<1x128xf32, #tpu.memory_space<vmem>>, %arg5: memref<2x128xf32, #tpu.memory_space<vmem>>, %arg6: memref<1x128xf32, #tpu.memory_space<vmem>>, %arg7: memref<256x256xbf16, #tpu.memory_space<vmem>>, %arg8: memref<1x256xf32, #tpu.memory_space<vmem>>, %arg9: memref<8x256xbf16, #tpu.memory_space<vmem>>) attributes {dimension_semantics = [#tpu.dimension_semantics<parallel>], iteration_bounds = array<i64: 1>, scalar_prefetch = 0 : i64, scratch_operands = 0 : i64, tpu.core_type = #tpu.core_type<tc>, window_params = [{transform_indices = @transform_0, window_bounds = array<i64: 8, 256>}, {pipeline_mode = #tpu.pipeline_mode<synchronous>, transform_indices = @transform_1, window_bounds = array<i64: 8, 2>}, {pipeline_mode = #tpu.pipeline_mode<synchronous>, transform_indices = @transform_2, window_bounds = array<i64: 256, 128>}, {pipeline_mode = #tpu.pipeline_mode<synchronous>, transform_indices = @transform_3, window_bounds = array<i64: 1, 128>}, {pipeline_mode = #tpu.pipeline_mode<synchronous>, transform_indices = @transform_4, window_bounds = array<i64: 2, 128>}, {pipeline_mode = #tpu.pipeline_mode<synchronous>, transform_indices = @transform_5, window_bounds = array<i64: 1, 128>}, {pipeline_mode = #tpu.pipeline_mode<synchronous>, transform_indices = @transform_6, window_bounds = array<i64: 256, 256>}, {pipeline_mode = #tpu.pipeline_mode<synchronous>, transform_indices = @transform_7, window_bounds = array<i64: 1, 256>}, {transform_indices = @transform_8, window_bounds = array<i64: 8, 256>}]} {
    %c0 = arith.constant 0 : index
    %c0_0 = arith.constant 0 : index
    %0 = vector.load %arg1[%c0, %c0_0] : memref<8x256xbf16, #tpu.memory_space<vmem>>, vector<8x256xbf16>
    %c8_i32 = arith.constant 8 : i32
    %1 = arith.muli %arg0, %c8_i32 : i32
    %2 = tpu.assume_multiple %1, 8 : i32
    %3 = arith.index_cast %2 : i32 to index
    %c0_1 = arith.constant 0 : index
    %4 = vector.load %arg2[%3, %c0_1] : memref<8x2xf32, #tpu.memory_space<vmem>>, vector<8x2xf32>
    %c0_2 = arith.constant 0 : index
    %c0_3 = arith.constant 0 : index
    %5 = vector.load %arg3[%c0_2, %c0_3] : memref<256x128xbf16, #tpu.memory_space<vmem>>, vector<256x128xbf16>
    %cst = arith.constant dense<0.000000e+00> : vector<8x128xf32>
    %6 = tpu.matmul %0, %5, %cst {dimension_numbers = #tpu.dot_dimension_numbers<[1], [0], [0], [1], [0, 0, 1, 1], [], []>} : vector<8x256xbf16>, vector<256x128xbf16>, vector<8x128xf32> -> vector<8x128xf32>
    %c0_4 = arith.constant 0 : index
    %c0_5 = arith.constant 0 : index
    %7 = vector.load %arg4[%c0_4, %c0_5] : memref<1x128xf32, #tpu.memory_space<vmem>>, vector<1x128xf32>
    %8 = vector.broadcast %7 : vector<1x128xf32> to vector<8x128xf32>
    %9 = arith.addf %6, %8 : vector<8x128xf32>
    %cst_6 = arith.constant 0.000000e+00 : f32
    %10 = vector.broadcast %cst_6 : f32 to vector<8x128xf32>
    %11 = arith.maximumf %9, %10 : vector<8x128xf32>
    %c0_7 = arith.constant 0 : index
    %c0_8 = arith.constant 0 : index
    %12 = vector.load %arg5[%c0_7, %c0_8] : memref<2x128xf32, #tpu.memory_space<vmem>>, vector<1x128xf32>
    %c1 = arith.constant 1 : index
    %c0_9 = arith.constant 0 : index
    %13 = vector.load %arg5[%c1, %c0_9] : memref<2x128xf32, #tpu.memory_space<vmem>>, vector<1x128xf32>
    %14 = vector.extract_strided_slice %4 {offsets = [0, 0], sizes = [8, 1], strides = [1, 1]} : vector<8x2xf32> to vector<8x1xf32>
    %15 = vector.broadcast %14 : vector<8x1xf32> to vector<8x128xf32>
    %16 = vector.broadcast %12 : vector<1x128xf32> to vector<8x128xf32>
    %17 = arith.mulf %15, %16 : vector<8x128xf32>
    %18 = vector.extract_strided_slice %4 {offsets = [0, 1], sizes = [8, 1], strides = [1, 1]} : vector<8x2xf32> to vector<8x1xf32>
    %19 = vector.broadcast %18 : vector<8x1xf32> to vector<8x128xf32>
    %20 = vector.broadcast %13 : vector<1x128xf32> to vector<8x128xf32>
    %21 = arith.mulf %19, %20 : vector<8x128xf32>
    %22 = arith.addf %17, %21 : vector<8x128xf32>
    %c0_10 = arith.constant 0 : index
    %c0_11 = arith.constant 0 : index
    %23 = vector.load %arg6[%c0_10, %c0_11] : memref<1x128xf32, #tpu.memory_space<vmem>>, vector<1x128xf32>
    %24 = vector.broadcast %23 : vector<1x128xf32> to vector<8x128xf32>
    %25 = arith.addf %22, %24 : vector<8x128xf32>
    %cst_12 = arith.constant 0.000000e+00 : f32
    %26 = vector.broadcast %cst_12 : f32 to vector<8x128xf32>
    %27 = arith.maximumf %25, %26 : vector<8x128xf32>
    %28 = arith.truncf %11 : vector<8x128xf32> to vector<8x128xbf16>
    %c0_13 = arith.constant 0 : index
    %c0_14 = arith.constant 0 : index
    %29 = vector.load %arg7[%c0_13, %c0_14] : memref<256x256xbf16, #tpu.memory_space<vmem>>, vector<128x256xbf16>
    %cst_15 = arith.constant dense<0.000000e+00> : vector<8x256xf32>
    %30 = tpu.matmul %28, %29, %cst_15 {dimension_numbers = #tpu.dot_dimension_numbers<[1], [0], [0], [1], [0, 0, 1, 1], [], []>} : vector<8x128xbf16>, vector<128x256xbf16>, vector<8x256xf32> -> vector<8x256xf32>
    %31 = arith.truncf %27 : vector<8x128xf32> to vector<8x128xbf16>
    %c128 = arith.constant 128 : index
    %c0_16 = arith.constant 0 : index
    %32 = vector.load %arg7[%c128, %c0_16] : memref<256x256xbf16, #tpu.memory_space<vmem>>, vector<128x256xbf16>
    %cst_17 = arith.constant dense<0.000000e+00> : vector<8x256xf32>
    %33 = tpu.matmul %31, %32, %cst_17 {dimension_numbers = #tpu.dot_dimension_numbers<[1], [0], [0], [1], [0, 0, 1, 1], [], []>} : vector<8x128xbf16>, vector<128x256xbf16>, vector<8x256xf32> -> vector<8x256xf32>
    %34 = arith.addf %30, %33 : vector<8x256xf32>
    %c0_18 = arith.constant 0 : index
    %c0_19 = arith.constant 0 : index
    %35 = vector.load %arg8[%c0_18, %c0_19] : memref<1x256xf32, #tpu.memory_space<vmem>>, vector<1x256xf32>
    %36 = vector.broadcast %35 : vector<1x256xf32> to vector<8x256xf32>
    %37 = arith.addf %34, %36 : vector<8x256xf32>
    %cst_20 = arith.constant 0.000000e+00 : f32
    %38 = vector.broadcast %cst_20 : f32 to vector<8x256xf32>
    %39 = arith.maximumf %37, %38 : vector<8x256xf32>
    %40 = arith.truncf %39 : vector<8x256xf32> to vector<8x256xbf16>
    %c0_21 = arith.constant 0 : index
    %c0_22 = arith.constant 0 : index
    %41 = vector.load %arg9[%c0_21, %c0_22] : memref<8x256xbf16, #tpu.memory_space<vmem>>, vector<8x256xbf16>
    tpu.vector_store %arg9[%c0_21, %c0_22], %40 {strides = array<i32>} : memref<8x256xbf16, #tpu.memory_space<vmem>>, vector<8x256xbf16>,
    return
  }
  func.func @transform_0(%arg0: i32) -> (i32, i32) {
    %c0_i32 = arith.constant 0 : i32
    %c0_i32_0 = arith.constant 0 : i32
    return %arg0, %c0_i32 : i32, i32
  }
  func.func @transform_1(%arg0: i32) -> (i32, i32) {
    %c0_i32 = arith.constant 0 : i32
    %c0_i32_0 = arith.constant 0 : i32
    %c0_i32_1 = arith.constant 0 : i32
    return %c0_i32, %c0_i32_0 : i32, i32
  }
  func.func @transform_2(%arg0: i32) -> (i32, i32) {
    %c0_i32 = arith.constant 0 : i32
    %c0_i32_0 = arith.constant 0 : i32
    %c0_i32_1 = arith.constant 0 : i32
    return %c0_i32, %c0_i32_0 : i32, i32
  }
  func.func @transform_3(%arg0: i32) -> (i32, i32) {
    %c0_i32 = arith.constant 0 : i32
    %c0_i32_0 = arith.constant 0 : i32
    %c0_i32_1 = arith.constant 0 : i32
    return %c0_i32, %c0_i32_0 : i32, i32
  }
  func.func @transform_4(%arg0: i32) -> (i32, i32) {
    %c0_i32 = arith.constant 0 : i32
    %c0_i32_0 = arith.constant 0 : i32
    %c0_i32_1 = arith.constant 0 : i32
    return %c0_i32, %c0_i32_0 : i32, i32
  }
  func.func @transform_5(%arg0: i32) -> (i32, i32) {
    %c0_i32 = arith.constant 0 : i32
    %c0_i32_0 = arith.constant 0 : i32
    %c0_i32_1 = arith.constant 0 : i32
    return %c0_i32, %c0_i32_0 : i32, i32
  }
  func.func @transform_6(%arg0: i32) -> (i32, i32) {
    %c0_i32 = arith.constant 0 : i32
    %c0_i32_0 = arith.constant 0 : i32
    %c0_i32_1 = arith.constant 0 : i32
    return %c0_i32, %c0_i32_0 : i32, i32
  }
  func.func @transform_7(%arg0: i32) -> (i32, i32) {
    %c0_i32 = arith.constant 0 : i32
    %c0_i32_0 = arith.constant 0 : i32
    %c0_i32_1 = arith.constant 0 : i32
    return %c0_i32, %c0_i32_0 : i32, i32
  }
  func.func @transform_8(%arg0: i32) -> (i32, i32) {
    %c0_i32 = arith.constant 0 : i32
    %c0_i32_0 = arith.constant 0 : i32
    return %arg0, %c0_i32 : i32, i32
  }
}

</mosaic_0001>

<llo_original>
// kernel: custom-call.3
$region0: #{custom-call.3}
  %s0 = inlined_call_operand.vmem [shape: f32[2,1,16,16], index: 0, kind: output, shape index: {}]

// kernel: custom-call.2
$region0: #{custom-call.2}
  %s0 = inlined_call_operand.vmem [shape: bf16[2,1,8,8], index: 0, kind: output, shape index: {}]

// kernel: glimpse_network_forward.1
$region0: #{glimpse_network_forward.1}
  #allocation0 [shape = 'u32[]', space=smem, size = 0x4, offset = 0x4, fixed_abs, tag = 'smem constant byte address 0x4 - core index']
  #allocation1 [shape = 'u32[144,128]{1,0:T(1,128)}', space=vmem, size = 0x12000, scoped, tag = 'internal scratch']
  %s0 = inlined_call_operand.vmem [shape: bf16[8,256], index: 0, kind: input, shape index: {}]
  %s1 = inlined_call_operand.vmem [shape: f32[8,2], index: 1, kind: input, shape index: {}]
  %s2 = inlined_call_operand.vmem [shape: bf16[256,128], index: 2, kind: input, shape index: {}]
  %s3 = inlined_call_operand.vmem [shape: f32[1,128], index: 3, kind: input, shape index: {}]
  %s4 = inlined_call_operand.vmem [shape: f32[2,128], index: 4, kind: input, shape index: {}]
  %s5 = inlined_call_operand.vmem [shape: f32[1,128], index: 5, kind: input, shape index: {}]
  %s6 = inlined_call_operand.vmem [shape: bf16[256,256], index: 6, kind: input, shape index: {}]
  %s7 = inlined_call_operand.vmem [shape: f32[1,256], index: 7, kind: input, shape index: {}]
  %s8 = inlined_call_operand.vmem [shape: bf16[8,256], index: 8, kind: output, shape index: {}]
  %s9 = sld [smem:[#allocation0]]
  $region42: #{glimpse_network_forward.1} parent=0
    _
  %s11 = ssub.s32 1, %s9
  %s12 = scalar_select 0, %s11, %s9
  // Predicated region
  $region2: #{glimpse_network_forward.1} parent=0 // pred_check
    _
  $region3: #{glimpse_network_forward.1} parent=0 // pred_check_branch
    %14 = sbr.rel (0) target = $region5
  $region4: #{glimpse_network_forward.1} parent=0 // pred_region
    _
  $region5: #{glimpse_network_forward.1} parent=0 // pred_fallthru
    _
  // Predicated region
  $region6: #{glimpse_network_forward.1} parent=0 // pred_check
    _
  $region7: #{glimpse_network_forward.1} parent=0 // pred_check_branch
    %16 = sbr.rel (0) target = $region9
  $region8: #{glimpse_network_forward.1} parent=0 // pred_region
    _
  $region9: #{glimpse_network_forward.1} parent=0 // pred_fallthru
    _
  // Predicated region
  $region10: #{glimpse_network_forward.1} parent=0 // pred_check
    _
  $region11: #{glimpse_network_forward.1} parent=0 // pred_check_branch
    %18 = sbr.rel (0) target = $region13
  $region12: #{glimpse_network_forward.1} parent=0 // pred_region
    _
  $region13: #{glimpse_network_forward.1} parent=0 // pred_fallthru
    _
  // Predicated region
  $region14: #{glimpse_network_forward.1} parent=0 // pred_check
    _
  $region15: #{glimpse_network_forward.1} parent=0 // pred_check_branch
    %20 = sbr.rel (0) target = $region17
  $region16: #{glimpse_network_forward.1} parent=0 // pred_region
    _
  $region17: #{glimpse_network_forward.1} parent=0 // pred_fallthru
    _
  // Predicated region
  $region18: #{glimpse_network_forward.1} parent=0 // pred_check
    _
  $region19: #{glimpse_network_forward.1} parent=0 // pred_check_branch
    %22 = sbr.rel (0) target = $region21
  $region20: #{glimpse_network_forward.1} parent=0 // pred_region
    _
  $region21: #{glimpse_network_forward.1} parent=0 // pred_fallthru
    _
  // Predicated region
  $region22: #{glimpse_network_forward.1} parent=0 // pred_check
    _
  $region23: #{glimpse_network_forward.1} parent=0 // pred_check_branch
    %24 = sbr.rel (0) target = $region25
  $region24: #{glimpse_network_forward.1} parent=0 // pred_region
    _
  $region25: #{glimpse_network_forward.1} parent=0 // pred_fallthru
    _
  // Predicated region
  $region26: #{glimpse_network_forward.1} parent=0 // pred_check
    _
  $region27: #{glimpse_network_forward.1} parent=0 // pred_check_branch
    %26 = sbr.rel (0) target = $region29
  $region28: #{glimpse_network_forward.1} parent=0 // pred_region
    _
  $region29: #{glimpse_network_forward.1} parent=0 // pred_fallthru
    _
  // Predicated region
  $region30: #{glimpse_network_forward.1} parent=0 // pred_check
    _
  $region31: #{glimpse_network_forward.1} parent=0 // pred_check_branch
    %28 = sbr.rel (0) target = $region33
  $region32: #{glimpse_network_forward.1} parent=0 // pred_region
    _
  $region33: #{glimpse_network_forward.1} parent=0 // pred_fallthru
    _
  %v30 = vld [vmem:[%s0] sm:$0xff]
  %s31 = smul.u32 0, 8
  %s32 = scalar_lea.vmem %s1, %s31
  %v33 = vld [vmem:[%s32] sm:$0xff]
  %v34 = vld [vmem:[%s2] sm:$0xf]
  %v35 = vld [vmem:[%s2 + $0x4] sm:$0xf]
  %v36 = vld [vmem:[%s2 + $0x8] sm:$0xf]
  %v37 = vld [vmem:[%s2 + $0xc] sm:$0xf]
  %v38 = vld [vmem:[%s2 + $0x10] sm:$0xf]
  %v39 = vld [vmem:[%s2 + $0x14] sm:$0xf]
  %v40 = vld [vmem:[%s2 + $0x18] sm:$0xf]
  %v41 = vld [vmem:[%s2 + $0x1c] sm:$0xf]
  %v42 = vld [vmem:[%s2 + $0x20] sm:$0xf]
  %v43 = vld [vmem:[%s2 + $0x24] sm:$0xf]
  %v44 = vld [vmem:[%s2 + $0x28] sm:$0xf]
  %v45 = vld [vmem:[%s2 + $0x2c] sm:$0xf]
  %v46 = vld [vmem:[%s2 + $0x30] sm:$0xf]
  %v47 = vld [vmem:[%s2 + $0x34] sm:$0xf]
  %v48 = vld [vmem:[%s2 + $0x38] sm:$0xf]
  %v49 = vld [vmem:[%s2 + $0x3c] sm:$0xf]
  %v50 = vld [vmem:[%s2 + $0x40] sm:$0xf]
  %v51 = vld [vmem:[%s2 + $0x44] sm:$0xf]
  %v52 = vld [vmem:[%s2 + $0x48] sm:$0xf]
  %v53 = vld [vmem:[%s2 + $0x4c] sm:$0xf]
  %v54 = vld [vmem:[%s2 + $0x50] sm:$0xf]
  %v55 = vld [vmem:[%s2 + $0x54] sm:$0xf]
  %v56 = vld [vmem:[%s2 + $0x58] sm:$0xf]
  %v57 = vld [vmem:[%s2 + $0x5c] sm:$0xf]
  %v58 = vld [vmem:[%s2 + $0x60] sm:$0xf]
  %v59 = vld [vmem:[%s2 + $0x64] sm:$0xf]
  %v60 = vld [vmem:[%s2 + $0x68] sm:$0xf]
  %v61 = vld [vmem:[%s2 + $0x6c] sm:$0xf]
  %v62 = vld [vmem:[%s2 + $0x70] sm:$0xf]
  %v63 = vld [vmem:[%s2 + $0x74] sm:$0xf]
  %v64 = vld [vmem:[%s2 + $0x78] sm:$0xf]
  %v65 = vld [vmem:[%s2 + $0x7c] sm:$0xf]
  %v66 = vld [vmem:[%s3] sm:$0x1]
  %v68 = vlaneseq
  %v69 = vshrl.u32 %v68, 7
  %v70 = vsub.s32 0, %v69
  %v71 = vrot.slane %v66, %v70
  %v74 = vunpack.c.l.b16 %v30
  %v75 = vunpack.c.h.b16 %v30
  %v76 = vpack.c.b16 %v74, %v74
  %v77 = vpack.c.b16 %v75, %v75
  %v112 = vunpack.c.l.b16 %v34
  %v113 = vunpack.c.l.b16 %v35
  %v114 = vunpack.c.l.b16 %v36
  %v115 = vunpack.c.l.b16 %v37
  %v116 = vunpack.c.l.b16 %v38
  %v117 = vunpack.c.l.b16 %v39
  %v118 = vunpack.c.l.b16 %v40
  %v119 = vunpack.c.l.b16 %v41
  %v120 = vunpack.c.l.b16 %v42
  %v121 = vunpack.c.l.b16 %v43
  %v122 = vunpack.c.l.b16 %v44
  %v123 = vunpack.c.l.b16 %v45
  %v124 = vunpack.c.l.b16 %v46
  %v125 = vunpack.c.l.b16 %v47
  %v126 = vunpack.c.l.b16 %v48
  %v127 = vunpack.c.l.b16 %v49
  %v128 = vunpack.c.l.b16 %v50
  %v129 = vunpack.c.l.b16 %v51
  %v130 = vunpack.c.l.b16 %v52
  %v131 = vunpack.c.l.b16 %v53
  %v132 = vunpack.c.l.b16 %v54
  %v133 = vunpack.c.l.b16 %v55
  %v134 = vunpack.c.l.b16 %v56
  %v135 = vunpack.c.l.b16 %v57
  %v136 = vunpack.c.l.b16 %v58
  %v137 = vunpack.c.l.b16 %v59
  %v138 = vunpack.c.l.b16 %v60
  %v139 = vunpack.c.l.b16 %v61
  %v140 = vunpack.c.l.b16 %v62
  %v141 = vunpack.c.l.b16 %v63
  %v142 = vunpack.c.l.b16 %v64
  %v143 = vunpack.c.l.b16 %v65
  %v144 = vpack.c.b16 %v113, %v112
  %v145 = vpack.c.b16 %v115, %v114
  %v146 = vpack.c.b16 %v117, %v116
  %v147 = vpack.c.b16 %v119, %v118
  %v148 = vpack.c.b16 %v121, %v120
  %v149 = vpack.c.b16 %v123, %v122
  %v150 = vpack.c.b16 %v125, %v124
  %v151 = vpack.c.b16 %v127, %v126
  %v152 = vpack.c.b16 %v129, %v128
  %v153 = vpack.c.b16 %v131, %v130
  %v154 = vpack.c.b16 %v133, %v132
  %v155 = vpack.c.b16 %v135, %v134
  %v156 = vpack.c.b16 %v137, %v136
  %v157 = vpack.c.b16 %v139, %v138
  %v158 = vpack.c.b16 %v141, %v140
  %v159 = vpack.c.b16 %v143, %v142
  %176 = vmatprep.subr.bf16.mxu0 0
  %177 = vmatpush1.bf16.msra.mxu0 %v144
  %178 = vmatprep.subr.bf16.mxu0 0
  %179 = vmatpush1.bf16.msra.mxu0 %v145
  %180 = vmatprep.subr.bf16.mxu0 0
  %181 = vmatpush1.bf16.msra.mxu0 %v146
  %182 = vmatprep.subr.bf16.mxu0 0
  %183 = vmatpush1.bf16.msra.mxu0 %v147
  %184 = vmatprep.subr.bf16.mxu0 0
  %185 = vmatpush1.bf16.msra.mxu0 %v148
  %186 = vmatprep.subr.bf16.mxu0 0
  %187 = vmatpush1.bf16.msra.mxu0 %v149
  %188 = vmatprep.subr.bf16.mxu0 0
  %189 = vmatpush1.bf16.msra.mxu0 %v150
  %190 = vmatprep.subr.bf16.mxu0 0
  %191 = vmatpush1.bf16.msra.mxu0 %v151
  %192 = vmatprep.subr.bf16.mxu0 0
  %193 = vmatpush1.bf16.msra.mxu0 %v152
  %194 = vmatprep.subr.bf16.mxu0 0
  %195 = vmatpush1.bf16.msra.mxu0 %v153
  %196 = vmatprep.subr.bf16.mxu0 0
  %197 = vmatpush1.bf16.msra.mxu0 %v154
  %198 = vmatprep.subr.bf16.mxu0 0
  %199 = vmatpush1.bf16.msra.mxu0 %v155
  %200 = vmatprep.subr.bf16.mxu0 0
  %201 = vmatpush1.bf16.msra.mxu0 %v156
  %202 = vmatprep.subr.bf16.mxu0 0
  %203 = vmatpush1.bf16.msra.mxu0 %v157
  %204 = vmatprep.subr.bf16.mxu0 0
  %205 = vmatpush1.bf16.msra.mxu0 %v158
  %206 = vmatprep.subr.bf16.mxu0 0
  %207 = vmatpush1.bf16.msra.mxu0 %v159
  %208 = vmatprep.mubr.bf16.mxu0 %v77
  %209 = vmatmul.mubr.bf16.gmra.mrb[0].mxu0 %v76
  %v210 = vpop.f32.mrb[0].mxu0
  %v211 = vadd.f32 %v71, %v210
  %v212 = vpop.f32.mrb[0].mxu0
  %v213 = vpop.f32.mrb[0].mxu0
  %v214 = vpop.f32.mrb[0].mxu0
  %215 = vdwg.mxu0
  %v216 = vmax.f32 %v211, 0.0
  %v217 = vld [vmem:[%s4] sm:$0x1]
  %v218 = vld [vmem:[%s4 + $0x1] sm:$0x1]
  %220 = vset.pattern.permute.xlu0 0
  %221 = vperm.xlu0 %220, %v33
  %v222 = vpop.permute.xlu0 %221
  %v224 = vlaneseq
  %v225 = vshrl.u32 %v224, 7
  %v226 = vsub.s32 0, %v225
  %v227 = vrot.slane %v217, %v226
  %v228 = vmul.f32 %v222, %v227
  %229 = vset.pattern.permute.xlu0 1
  %230 = vperm.xlu0 %229, %v33
  %v231 = vpop.permute.xlu0 %230
  %v233 = vlaneseq
  %v234 = vshrl.u32 %v233, 7
  %v235 = vsub.s32 0, %v234
  %v236 = vrot.slane %v218, %v235
  %v237 = vmul.f32 %v231, %v236
  %v238 = vadd.f32 %v228, %v237
  %v239 = vld [vmem:[%s5] sm:$0x1]
  %v241 = vlaneseq
  %v242 = vshrl.u32 %v241, 7
  %v243 = vsub.s32 0, %v242
  %v244 = vrot.slane %v239, %v243
  %v246 = vadd.f32 %v238, %v244
  %v247 = vmax.f32 %v246, 0.0
  %v248 = vpack.c.bf16 %v216, %v216
  %v249 = vld [vmem:[%s6] sm:$0xff]
  %v250 = vld [vmem:[%s6 + $0x8] sm:$0xff]
  %v251 = vld [vmem:[%s6 + $0x10] sm:$0xff]
  %v252 = vld [vmem:[%s6 + $0x18] sm:$0xff]
  %v253 = vld [vmem:[%s6 + $0x20] sm:$0xff]
  %v254 = vld [vmem:[%s6 + $0x28] sm:$0xff]
  %v255 = vld [vmem:[%s6 + $0x30] sm:$0xff]
  %v256 = vld [vmem:[%s6 + $0x38] sm:$0xff]
  %v257 = vld [vmem:[%s6 + $0x40] sm:$0xff]
  %v258 = vld [vmem:[%s6 + $0x48] sm:$0xff]
  %v259 = vld [vmem:[%s6 + $0x50] sm:$0xff]
  %v260 = vld [vmem:[%s6 + $0x58] sm:$0xff]
  %v261 = vld [vmem:[%s6 + $0x60] sm:$0xff]
  %v262 = vld [vmem:[%s6 + $0x68] sm:$0xff]
  %v263 = vld [vmem:[%s6 + $0x70] sm:$0xff]
  %v264 = vld [vmem:[%s6 + $0x78] sm:$0xff]
  %v265 = vpack.c.bf16 %v247, %v247
  %v266 = vld [vmem:[%s6 + $0x80] sm:$0xff]
  %v267 = vld [vmem:[%s6 + $0x88] sm:$0xff]
  %v268 = vld [vmem:[%s6 + $0x90] sm:$0xff]
  %v269 = vld [vmem:[%s6 + $0x98] sm:$0xff]
  %v270 = vld [vmem:[%s6 + $0xa0] sm:$0xff]
  %v271 = vld [vmem:[%s6 + $0xa8] sm:$0xff]
  %v272 = vld [vmem:[%s6 + $0xb0] sm:$0xff]
  %v273 = vld [vmem:[%s6 + $0xb8] sm:$0xff]
  %v274 = vld [vmem:[%s6 + $0xc0] sm:$0xff]
  %v275 = vld [vmem:[%s6 + $0xc8] sm:$0xff]
  %v276 = vld [vmem:[%s6 + $0xd0] sm:$0xff]
  %v277 = vld [vmem:[%s6 + $0xd8] sm:$0xff]
  %v278 = vld [vmem:[%s6 + $0xe0] sm:$0xff]
  %v279 = vld [vmem:[%s6 + $0xe8] sm:$0xff]
  %v280 = vld [vmem:[%s6 + $0xf0] sm:$0xff]
  %v281 = vld [vmem:[%s6 + $0xf8] sm:$0xff]
  %v298 = vunpack.c.l.b16 %v266
  %v299 = vunpack.c.h.b16 %v266
  %v300 = vunpack.c.l.b16 %v267
  %v301 = vunpack.c.h.b16 %v267
  %v302 = vunpack.c.l.b16 %v268
  %v303 = vunpack.c.h.b16 %v268
  %v304 = vunpack.c.l.b16 %v269
  %v305 = vunpack.c.h.b16 %v269
  %v306 = vunpack.c.l.b16 %v270
  %v307 = vunpack.c.h.b16 %v270
  %v308 = vunpack.c.l.b16 %v271
  %v309 = vunpack.c.h.b16 %v271
  %v310 = vunpack.c.l.b16 %v272
  %v311 = vunpack.c.h.b16 %v272
  %v312 = vunpack.c.l.b16 %v273
  %v313 = vunpack.c.h.b16 %v273
  %v314 = vunpack.c.l.b16 %v274
  %v315 = vunpack.c.h.b16 %v274
  %v316 = vunpack.c.l.b16 %v275
  %v317 = vunpack.c.h.b16 %v275
  %v318 = vunpack.c.l.b16 %v276
  %v319 = vunpack.c.h.b16 %v276
  %v320 = vunpack.c.l.b16 %v277
  %v321 = vunpack.c.h.b16 %v277
  %v322 = vunpack.c.l.b16 %v278
  %v323 = vunpack.c.h.b16 %v278
  %v324 = vunpack.c.l.b16 %v279
  %v325 = vunpack.c.h.b16 %v279
  %v326 = vunpack.c.l.b16 %v280
  %v327 = vunpack.c.h.b16 %v280
  %v328 = vunpack.c.l.b16 %v281
  %v329 = vunpack.c.h.b16 %v281
  %v330 = vpack.c.b16 %v300, %v298
  %v331 = vpack.c.b16 %v301, %v299
  %v332 = vpack.c.b16 %v304, %v302
  %v333 = vpack.c.b16 %v305, %v303
  %v334 = vpack.c.b16 %v308, %v306
  %v335 = vpack.c.b16 %v309, %v307
  %v336 = vpack.c.b16 %v312, %v310
  %v337 = vpack.c.b16 %v313, %v311
  %v338 = vpack.c.b16 %v316, %v314
  %v339 = vpack.c.b16 %v317, %v315
  %v340 = vpack.c.b16 %v320, %v318
  %v341 = vpack.c.b16 %v321, %v319
  %v342 = vpack.c.b16 %v324, %v322
  %v343 = vpack.c.b16 %v325, %v323
  %v344 = vpack.c.b16 %v328, %v326
  %v345 = vpack.c.b16 %v329, %v327
  %362 = vmatprep.subr.bf16.mxu0 %v331
  %363 = vmatpush1.bf16.msra.mxu0 %v330
  %364 = vmatprep.subr.bf16.mxu0 %v333
  %365 = vmatpush1.bf16.msra.mxu0 %v332
  %366 = vmatprep.subr.bf16.mxu0 %v335
  %367 = vmatpush1.bf16.msra.mxu0 %v334
  %368 = vmatprep.subr.bf16.mxu0 %v337
  %369 = vmatpush1.bf16.msra.mxu0 %v336
  %370 = vmatprep.subr.bf16.mxu0 %v339
  %371 = vmatpush1.bf16.msra.mxu0 %v338
  %372 = vmatprep.subr.bf16.mxu0 %v341
  %373 = vmatpush1.bf16.msra.mxu0 %v340
  %374 = vmatprep.subr.bf16.mxu0 %v343
  %375 = vmatpush1.bf16.msra.mxu0 %v342
  %376 = vmatprep.subr.bf16.mxu0 %v345
  %377 = vmatpush1.bf16.msra.mxu0 %v344
  %378 = vmatprep.subr.bf16.mxu0 0
  %379 = vmatpush1.bf16.msra.mxu0 0
  %380 = vmatprep.subr.bf16.mxu0 0
  %381 = vmatpush1.bf16.msra.mxu0 0
  %382 = vmatprep.subr.bf16.mxu0 0
  %383 = vmatpush1.bf16.msra.mxu0 0
  %384 = vmatprep.subr.bf16.mxu0 0
  %385 = vmatpush1.bf16.msra.mxu0 0
  %386 = vmatprep.subr.bf16.mxu0 0
  %387 = vmatpush1.bf16.msra.mxu0 0
  %388 = vmatprep.subr.bf16.mxu0 0
  %389 = vmatpush1.bf16.msra.mxu0 0
  %390 = vmatprep.subr.bf16.mxu0 0
  %391 = vmatpush1.bf16.msra.mxu0 0
  %392 = vmatprep.subr.bf16.mxu0 0
  %393 = vmatpush1.bf16.msra.mxu0 0
  %394 = vmatprep.mubr.bf16.mxu0 0
  %395 = vmatmul.mubr.bf16.gmra.mrb[0].mxu0 %v265
  %v396 = vpop.f32.mrb[0].mxu0
  %v397 = vadd.f32 0.0, %v396
  %v398 = vpop.f32.mrb[0].mxu0
  %v399 = vadd.f32 0.0, %v398
  %v400 = vpop.f32.mrb[0].mxu0
  %v401 = vpop.f32.mrb[0].mxu0
  %402 = vdwg.mxu0
  %v419 = vunpack.c.l.b16 %v249
  %v420 = vunpack.c.h.b16 %v249
  %v421 = vunpack.c.l.b16 %v250
  %v422 = vunpack.c.h.b16 %v250
  %v423 = vunpack.c.l.b16 %v251
  %v424 = vunpack.c.h.b16 %v251
  %v425 = vunpack.c.l.b16 %v252
  %v426 = vunpack.c.h.b16 %v252
  %v427 = vunpack.c.l.b16 %v253
  %v428 = vunpack.c.h.b16 %v253
  %v429 = vunpack.c.l.b16 %v254
  %v430 = vunpack.c.h.b16 %v254
  %v431 = vunpack.c.l.b16 %v255
  %v432 = vunpack.c.h.b16 %v255
  %v433 = vunpack.c.l.b16 %v256
  %v434 = vunpack.c.h.b16 %v256
  %v435 = vunpack.c.l.b16 %v257
  %v436 = vunpack.c.h.b16 %v257
  %v437 = vunpack.c.l.b16 %v258
  %v438 = vunpack.c.h.b16 %v258
  %v439 = vunpack.c.l.b16 %v259
  %v440 = vunpack.c.h.b16 %v259
  %v441 = vunpack.c.l.b16 %v260
  %v442 = vunpack.c.h.b16 %v260
  %v443 = vunpack.c.l.b16 %v261
  %v444 = vunpack.c.h.b16 %v261
  %v445 = vunpack.c.l.b16 %v262
  %v446 = vunpack.c.h.b16 %v262
  %v447 = vunpack.c.l.b16 %v263
  %v448 = vunpack.c.h.b16 %v263
  %v449 = vunpack.c.l.b16 %v264
  %v450 = vunpack.c.h.b16 %v264
  %v451 = vpack.c.b16 %v421, %v419
  %v452 = vpack.c.b16 %v422, %v420
  %v453 = vpack.c.b16 %v425, %v423
  %v454 = vpack.c.b16 %v426, %v424
  %v455 = vpack.c.b16 %v429, %v427
  %v456 = vpack.c.b16 %v430, %v428
  %v457 = vpack.c.b16 %v433, %v431
  %v458 = vpack.c.b16 %v434, %v432
  %v459 = vpack.c.b16 %v437, %v435
  %v460 = vpack.c.b16 %v438, %v436
  %v461 = vpack.c.b16 %v441, %v439
  %v462 = vpack.c.b16 %v442, %v440
  %v463 = vpack.c.b16 %v445, %v443
  %v464 = vpack.c.b16 %v446, %v444
  %v465 = vpack.c.b16 %v449, %v447
  %v466 = vpack.c.b16 %v450, %v448
  %483 = vmatprep.subr.bf16.mxu0 %v452
  %484 = vmatpush1.bf16.msra.mxu0 %v451
  %485 = vmatprep.subr.bf16.mxu0 %v454
  %486 = vmatpush1.bf16.msra.mxu0 %v453
  %487 = vmatprep.subr.bf16.mxu0 %v456
  %488 = vmatpush1.bf16.msra.mxu0 %v455
  %489 = vmatprep.subr.bf16.mxu0 %v458
  %490 = vmatpush1.bf16.msra.mxu0 %v457
  %491 = vmatprep.subr.bf16.mxu0 %v460
  %492 = vmatpush1.bf16.msra.mxu0 %v459
  %493 = vmatprep.subr.bf16.mxu0 %v462
  %494 = vmatpush1.bf16.msra.mxu0 %v461
  %495 = vmatprep.subr.bf16.mxu0 %v464
  %496 = vmatpush1.bf16.msra.mxu0 %v463
  %497 = vmatprep.subr.bf16.mxu0 %v466
  %498 = vmatpush1.bf16.msra.mxu0 %v465
  %499 = vmatprep.subr.bf16.mxu0 0
  %500 = vmatpush1.bf16.msra.mxu0 0
  %501 = vmatprep.subr.bf16.mxu0 0
  %502 = vmatpush1.bf16.msra.mxu0 0
  %503 = vmatprep.subr.bf16.mxu0 0
  %504 = vmatpush1.bf16.msra.mxu0 0
  %505 = vmatprep.subr.bf16.mxu0 0
  %506 = vmatpush1.bf16.msra.mxu0 0
  %507 = vmatprep.subr.bf16.mxu0 0
  %508 = vmatpush1.bf16.msra.mxu0 0
  %509 = vmatprep.subr.bf16.mxu0 0
  %510 = vmatpush1.bf16.msra.mxu0 0
  %511 = vmatprep.subr.bf16.mxu0 0
  %512 = vmatpush1.bf16.msra.mxu0 0
  %513 = vmatprep.subr.bf16.mxu0 0
  %514 = vmatpush1.bf16.msra.mxu0 0
  %515 = vmatprep.mubr.bf16.mxu0 0
  %516 = vmatmul.mubr.bf16.gmra.mrb[0].mxu0 %v248
  %v517 = vpop.f32.mrb[0].mxu0
  %v518 = vadd.f32 %v397, %v517
  %v519 = vpop.f32.mrb[0].mxu0
  %v520 = vadd.f32 %v399, %v519
  %v521 = vpop.f32.mrb[0].mxu0
  %v522 = vpop.f32.mrb[0].mxu0
  %523 = vdwg.mxu0
  %v524 = vld [vmem:[%s7] sm:$0x3]
  %v526 = vlaneseq
  %v527 = vshrl.u32 %v526, 7
  %v528 = vsub.s32 0, %v527
  %v529 = vrot.slane %v524, %v528
  %v530 = vlaneseq
  %v531 = vshrl.u32 %v530, 7
  %v532 = vsub.s32 1, %v531
  %v533 = vrot.slane %v524, %v532
  %v536 = vadd.f32 %v518, %v529
  %v537 = vadd.f32 %v520, %v533
  %v538 = vmax.f32 %v536, 0.0
  %v539 = vmax.f32 %v537, 0.0
  %v540 = vpack.c.bf16 %v538, %v538
  %v541 = vpack.c.bf16 %v539, %v539
  %v544 = vunpack.c.l.b16 %v540
  %v545 = vunpack.c.l.b16 %v541
  %v546 = vpack.c.b16 %v545, %v544
  %548 = vst [vmem:[%s8] sm:$0xff] %v546
  // Predicated region
  $region34: #{glimpse_network_forward.1} parent=0 // pred_check
    _
  $region35: #{glimpse_network_forward.1} parent=0 // pred_check_branch
    %550 = sbr.rel (0) target = $region37
  $region36: #{glimpse_network_forward.1} parent=0 // pred_region
    _
  $region37: #{glimpse_network_forward.1} parent=0 // pred_fallthru
    _
  // Predicated region
  $region38: #{glimpse_network_forward.1} parent=0 // pred_check
    _
  $region39: #{glimpse_network_forward.1} parent=0 // pred_check_branch
    %552 = sbr.rel (0) target = $region41
  $region40: #{glimpse_network_forward.1} parent=0 // pred_region
    _
  $region41: #{glimpse_network_forward.1} parent=0 // pred_fallthru
    _

</llo_original>
